<compile_context>
chip_gen: v6e
topology: v6e:2x2x1
jax: 0.10.0
libtpu: 0.0.40
codegen_flags: <defaults>
</compile_context>

<pallas_src>
import functools

import jax
import jax.numpy as jnp
from jax.experimental import pallas as pl
from jax.experimental.pallas import tpu as pltpu


# ---------------------------------------------------------------------------
# Generation-aware limits.
# ---------------------------------------------------------------------------
try:
    _TPU_VMEM_BYTES = int(
        getattr(pltpu.get_tpu_info(), "vmem_capacity_bytes", 64 * 1024 * 1024)
    )
except Exception:  # pragma: no cover - CPU/interpret fallback
    _TPU_VMEM_BYTES = 64 * 1024 * 1024

if _TPU_VMEM_BYTES >= 128 * 1024 * 1024:
    # v5e / v6e: 128 MiB physical VMEM -> room for bigger tiles & window.
    _VMEM_LIMIT_BYTES = 64 * 1024 * 1024
    _MAX_TILE = 1024
else:
    # v7x (64 MiB physical) or unknown: stay conservative.
    _VMEM_LIMIT_BYTES = 32 * 1024 * 1024
    _MAX_TILE = 512


def _round_up(x, m):
    return ((x + m - 1) // m) * m


def _choose_tiles(N, IN, OUT_pad, in_itemsize, out_itemsize, sublane):
    """Pick (tN, tO). tO is a multiple of 128 dividing OUT_pad; tN a multiple of
    `sublane`. Tiles are shrunk until the double-buffered working set fits the
    scoped-VMEM budget (no full-extent fallback blocks)."""
    tO = 128
    for cand in range(min(_MAX_TILE, OUT_pad), 127, -128):
        if OUT_pad % cand == 0:
            tO = cand
            break

    tN = min(_MAX_TILE, _round_up(N, sublane))

    budget = int(_VMEM_LIMIT_BYTES * 0.75)

    def working_set(tn, to):
        # x block + weight block + bias block + output block, double-buffered.
        return 2 * (tn * IN * in_itemsize + IN * to * in_itemsize
                    + to * 4 + tn * to * out_itemsize)

    while working_set(tN, tO) > budget and tN > sublane:
        tN = max(sublane, (tN // 2 // sublane) * sublane)
    if working_set(tN, tO) > budget:
        tO = 128  # always divides OUT_pad
    # TODO(synk): K-tile IN with an f32 accumulator if IN alone still overflows.
    return tN, tO


# ---------------------------------------------------------------------------
# Kernel.
# ---------------------------------------------------------------------------
def _matmul_bias_kernel(x_ref, w_ref, b_ref, o_ref):
    # x_ref: (tN, IN), w_ref: (IN, tO), b_ref: (1, tO), o_ref: (tN, tO)
    acc = jnp.dot(x_ref[...], w_ref[...], preferred_element_type=jnp.float32)
    o_ref[...] = (acc + b_ref[...].astype(jnp.float32)).astype(o_ref.dtype)


# ---------------------------------------------------------------------------
# Wrapper.
# ---------------------------------------------------------------------------
def _forward(x, weight, bias, use_bf16_matmul):
    shared_x = (x.ndim == 2)
    E, IN, OUT = weight.shape
    N = x.shape[0] if shared_x else x.shape[1]
    out_dtype = x.dtype
    out_itemsize = jnp.dtype(out_dtype).itemsize

    in_itemsize = 2 if use_bf16_matmul else jnp.dtype(x.dtype).itemsize
    sublane = 8 if in_itemsize >= 4 else 16  # bf16 packs 16 rows per sublane tile

    OUT_pad = _round_up(OUT, 128)
    tN, tO = _choose_tiles(N, IN, OUT_pad, in_itemsize, out_itemsize, sublane)
    N_pad = _round_up(N, tN)

    # Wrapper-side dtype/layout plumbing (all no-ops when already conforming).
    if use_bf16_matmul:
        x = x.astype(jnp.bfloat16)
        weight = weight.astype(jnp.bfloat16)
    if shared_x:
        x = jnp.pad(x, ((0, N_pad - N), (0, 0)))
    else:
        x = jnp.pad(x, ((0, 0), (0, N_pad - N), (0, 0)))
    weight = jnp.pad(weight, ((0, 0), (0, 0), (0, OUT_pad - OUT)))
    bias = jnp.pad(bias.astype(jnp.float32), ((0, 0), (0, 0), (0, OUT_pad - OUT)))

    n_tiles = N_pad // tN
    o_tiles = OUT_pad // tO

    if shared_x:
        # Output-tile / ensemble axes innermost: the (large) x tile is DMA'd
        # once per N-tile while the small weight/bias/output blocks stream.
        grid = (n_tiles, E, o_tiles)
        x_spec = pl.BlockSpec((tN, IN), lambda i, e, o: (i, 0))
        w_spec = pl.BlockSpec((None, IN, tO), lambda i, e, o: (e, 0, o))
        b_spec = pl.BlockSpec((None, 1, tO), lambda i, e, o: (e, 0, o))
        out_spec = pl.BlockSpec((None, tN, tO), lambda i, e, o: (e, i, o))
        x_bytes = N_pad * IN * in_itemsize
    else:
        # x[e, i] block stays resident across the OUT-tile axis.
        grid = (E, n_tiles, o_tiles)
        x_spec = pl.BlockSpec((None, tN, IN), lambda e, i, o: (e, i, 0))
        w_spec = pl.BlockSpec((None, IN, tO), lambda e, i, o: (e, 0, o))
        b_spec = pl.BlockSpec((None, 1, tO), lambda e, i, o: (e, 0, o))
        out_spec = pl.BlockSpec((None, tN, tO), lambda e, i, o: (e, i, o))
        x_bytes = E * N_pad * IN * in_itemsize

    cost = pl.CostEstimate(
        flops=2 * E * N_pad * IN * OUT_pad,
        transcendentals=0,
        bytes_accessed=(
            x_bytes
            + n_tiles * E * IN * OUT_pad * in_itemsize  # weight re-streamed per N tile
            + E * OUT_pad * 4
            + E * N_pad * OUT_pad * out_itemsize
        ),
    )

    out = pl.pallas_call(
        _matmul_bias_kernel,
        out_shape=jax.ShapeDtypeStruct((E, N_pad, OUT_pad), out_dtype),
        grid_spec=pltpu.PrefetchScalarGridSpec(
            num_scalar_prefetch=0,
            grid=grid,
            in_specs=[x_spec, w_spec, b_spec],
            out_specs=out_spec,
        ),
        compiler_params=pltpu.CompilerParams(
            dimension_semantics=("parallel", "parallel", "parallel"),
            vmem_limit_bytes=_VMEM_LIMIT_BYTES,
        ),
        cost_estimate=cost,
    )(x, weight, bias)

    if N_pad != N or OUT_pad != OUT:
        out = out[:, :N, :OUT]
    return out


@functools.partial(jax.jit, static_argnames=("use_bf16_matmul",))
def ensemble_linear(x, weight, bias, use_bf16_matmul=False):
    """Forward pass of EnsembleLinear.

    x:      (N, IN)  or (E, N, IN)
    weight: (E, IN, OUT)
    bias:   (E, 1, OUT)
    returns (E, N, OUT); dtype follows x.dtype.

    The module's `set_select` is expressed by passing already-sliced
    weight[select] / bias[select] to this function.
    """
    E = weight.shape[0]
    if x.ndim != 2:
        assert x.ndim == 3 and x.shape[0] == E
    return _forward(x, weight, bias, use_bf16_matmul)


# ---------------------------------------------------------------------------
# Parameter init & reference (for the self-test).
# ---------------------------------------------------------------------------
def init_params(key, in_features, out_features, ensemble_size=7):
    # torch.nn.init.trunc_normal_(weight, std=1/(2*sqrt(in_features))).
    std = 1.0 / (2.0 * in_features ** 0.5)
    lower = -2.0 / std
    upper = 2.0 / std
    w = jax.random.truncated_normal(
        key, lower, upper, (ensemble_size, in_features, out_features), jnp.float32
    ) * std
    b = jnp.zeros((ensemble_size, 1, out_features), jnp.float32)
    return w, b


def reference_forward(x, weight, bias):
    if x.ndim == 2:
        y = jnp.einsum("ij,bjk->bik", x, weight)
    else:
        y = jnp.einsum("bij,bjk->bik", x, weight)
    return y + bias


if __name__ == "__main__":
    key = jax.random.PRNGKey(0)
    k_w, k_x2, k_x3 = jax.random.split(key, 3)

    ensemble_size = 7
    in_features = 32
    out_features = 32
    batch = 10  # deliberately not a multiple of 8 -> exercises N padding

    weight, bias = init_params(k_w, in_features, out_features, ensemble_size)

    # 2-D input: x shared across ensemble members.
    x2 = jax.random.normal(k_x2, (batch, in_features), jnp.float32)
    out2 = ensemble_linear(x2, weight, bias)
    jax.block_until_ready(out2)
    ref2 = reference_forward(x2, weight, bias)
    assert out2.shape == (ensemble_size, batch, out_features)
    assert jnp.allclose(out2, ref2, atol=1e-5, rtol=1e-5)

    # 3-D input: per-ensemble-member inputs.
    x3 = jax.random.normal(k_x3, (ensemble_size, batch, in_features), jnp.float32)
    out3 = ensemble_linear(x3, weight, bias)
    jax.block_until_ready(out3)
    ref3 = reference_forward(x3, weight, bias)
    assert out3.shape == (ensemble_size, batch, out_features)
    assert jnp.allclose(out3, ref3, atol=1e-5, rtol=1e-5)

    # Optional bf16-MXU path (wrapper-side cast) -- looser tolerance.
    out2_bf16 = ensemble_linear(x2, weight, bias, use_bf16_matmul=True)
    jax.block_until_ready(out2_bf16)
    assert jnp.allclose(out2_bf16, ref2, atol=2e-2, rtol=2e-2)

    print("KERNEL_OK")
</pallas_src>

<mosaic_0001>
module attributes {stable_mosaic.version = 11 : i64} {
  func.func @_matmul_bias_kernel(%arg0: i32, %arg1: i32, %arg2: i32, %arg3: memref<16x32xf32, #tpu.memory_space<vmem>>, %arg4: memref<1x32x128xf32, #tpu.memory_space<vmem>>, %arg5: memref<1x1x128xf32, #tpu.memory_space<vmem>>, %arg6: memref<1x16x128xf32, #tpu.memory_space<vmem>>) attributes {dimension_semantics = [#tpu.dimension_semantics<parallel>, #tpu.dimension_semantics<parallel>, #tpu.dimension_semantics<parallel>], iteration_bounds = array<i64: 1, 7, 1>, scalar_prefetch = 0 : i64, scratch_operands = 0 : i64, tpu.core_type = #tpu.core_type<tc>, window_params = [{transform_indices = @transform_0, window_bounds = array<i64: 16, 32>}, {transform_indices = @transform_1, window_bounds = array<i64: 1, 32, 128>}, {transform_indices = @transform_2, window_bounds = array<i64: 1, 1, 128>}, {transform_indices = @transform_3, window_bounds = array<i64: 1, 16, 128>}]} {
    %c0 = arith.constant 0 : index
    %c0_0 = arith.constant 0 : index
    %0 = vector.load %arg3[%c0, %c0_0] : memref<16x32xf32, #tpu.memory_space<vmem>>, vector<16x32xf32>
    %c0_1 = arith.constant 0 : index
    %c0_2 = arith.constant 0 : index
    %c0_3 = arith.constant 0 : index
    %1 = vector.load %arg4[%c0_1, %c0_2, %c0_3] : memref<1x32x128xf32, #tpu.memory_space<vmem>>, vector<1x32x128xf32>
    %2 = vector.shape_cast %1 : vector<1x32x128xf32> to vector<32x128xf32>
    %cst = arith.constant dense<0.000000e+00> : vector<16x128xf32>
    %3 = tpu.matmul %0, %2, %cst {dimension_numbers = #tpu.dot_dimension_numbers<[1], [0], [0], [1], [0, 0, 1, 1], [], []>} : vector<16x32xf32>, vector<32x128xf32>, vector<16x128xf32> -> vector<16x128xf32>
    %c0_4 = arith.constant 0 : index
    %c0_5 = arith.constant 0 : index
    %c0_6 = arith.constant 0 : index
    %4 = vector.load %arg5[%c0_4, %c0_5, %c0_6] : memref<1x1x128xf32, #tpu.memory_space<vmem>>, vector<1x1x128xf32>
    %5 = vector.shape_cast %4 : vector<1x1x128xf32> to vector<1x128xf32>
    %6 = vector.broadcast %5 : vector<1x128xf32> to vector<16x128xf32>
    %7 = arith.addf %3, %6 : vector<16x128xf32>
    %c0_7 = arith.constant 0 : index
    %c0_8 = arith.constant 0 : index
    %c0_9 = arith.constant 0 : index
    %8 = vector.load %arg6[%c0_7, %c0_8, %c0_9] : memref<1x16x128xf32, #tpu.memory_space<vmem>>, vector<1x16x128xf32>
    %9 = vector.shape_cast %8 : vector<1x16x128xf32> to vector<16x128xf32>
    %10 = vector.shape_cast %7 : vector<16x128xf32> to vector<1x16x128xf32>
    tpu.vector_store %arg6[%c0_7, %c0_8, %c0_9], %10 {strides = array<i32>} : memref<1x16x128xf32, #tpu.memory_space<vmem>>, vector<1x16x128xf32>,
    return
  }
  func.func @transform_0(%arg0: i32, %arg1: i32, %arg2: i32) -> (i32, i32) {
    %c0_i32 = arith.constant 0 : i32
    %c0_i32_0 = arith.constant 0 : i32
    return %arg0, %c0_i32 : i32, i32
  }
  func.func @transform_1(%arg0: i32, %arg1: i32, %arg2: i32) -> (i32, i32, i32) {
    %c0_i32 = arith.constant 0 : i32
    %c0_i32_0 = arith.constant 0 : i32
    return %arg1, %c0_i32, %arg2 : i32, i32, i32
  }
  func.func @transform_2(%arg0: i32, %arg1: i32, %arg2: i32) -> (i32, i32, i32) {
    %c0_i32 = arith.constant 0 : i32
    %c0_i32_0 = arith.constant 0 : i32
    return %arg1, %c0_i32, %arg2 : i32, i32, i32
  }
  func.func @transform_3(%arg0: i32, %arg1: i32, %arg2: i32) -> (i32, i32, i32) {
    %c0_i32 = arith.constant 0 : i32
    return %arg1, %arg0, %arg2 : i32, i32, i32
  }
}

</mosaic_0001>

<llo_original>
// kernel: ensemble_linear.1
$region0: #{ensemble_linear.1}
  #allocation0 [shape = 'u32[]', space=smem, size = 0x4, offset = 0x4, fixed_abs, tag = 'smem constant byte address 0x4 - core index']
  #allocation1 [shape = 'u32[144,128]{1,0:T(1,128)}', space=vmem, size = 0x12000, scoped, tag = 'internal scratch']
  %s0 = inlined_call_operand.vmem [shape: f32[16,32], index: 0, kind: input, shape index: {}]
  %s1 = inlined_call_operand.vmem [shape: f32[7,32,128], index: 1, kind: input, shape index: {}]
  %s2 = inlined_call_operand.vmem [shape: f32[7,1,128], index: 2, kind: input, shape index: {}]
  %s3 = inlined_call_operand.vmem [shape: f32[7,16,128], index: 3, kind: output, shape index: {}]
  %s4 = sld [smem:[#allocation0]]
  $region45: #{ensemble_linear.1} parent=0
    _
  %s6 = ssub.s32 1, %s4
  %s7 = scalar_select 0, %s6, %s4
  loop: start=0, step=1, limit=9
  $region2: #{ensemble_linear.1} parent=0 // loop_pre_header
    _
  $region3: #{ensemble_linear.1} parent=0 // loop_header
    %s9 = sphi 0, %s13
    %p10 = scmp.ge.s32.totalorder %s9, 9
    %s16 = sphi 0, %s35
    %s17 = sphi 0, %s31
    %s18 = sphi 0, %s27
    %s19 = sphi 0, %s16
    %s20 = sphi 0, %s17
    %s21 = sphi 0, %s18
    %s22 = sphi 0, %s19
    %s23 = sphi 0, %s20
    %s24 = sphi 0, %s21
    %s38 = sphi 0, %s40
    %s41 = sphi 0, %s38
    %s42 = sphi 0, %s41
    %s58 = sphi 0, %s42
    %s66 = sphi 0, %s68
    %s69 = sphi 0, %s66
    %s70 = sphi 0, %s69
    %s86 = sphi 0, %s70
    %s94 = sphi 0, %s96
    %s97 = sphi 0, %s94
    %s98 = sphi 0, %s97
    %s114 = sphi 0, %s98
    %s124 = sphi 0, %s126
    %s127 = sphi 0, %s124
    %s128 = sphi 0, %s127
    %s144 = sphi 0, %s128
  $region4: #{ensemble_linear.1} parent=0 // loop_header_branch
    %12 = sbr.rel (%p10) target = $region8
  $region5: #{ensemble_linear.1} parent=0 // loop_body
    %s14 = ssub.s32 %s9, 1
    %s15 = ssub.s32 %s9, 2
    %s25 = sadd.s32 1, %s18
    %p26 = scmp.ge.s32.totalorder %s25, 1
    %s27 = scalar_select %p26, 0, %s25
    %s28 = sadd.s32 1, %s17
    %s29 = scalar_select %p26, %s28, %s17
    %p30 = scmp.ge.s32.totalorder %s29, 7
    %s31 = scalar_select %p30, 0, %s29
    %s32 = sadd.s32 1, %s16
    %s33 = scalar_select %p30, %s32, %s16
    %p34 = scmp.ge.s32.totalorder %s33, 1
    %s35 = scalar_select %p34, 0, %s33
    %s36 = ssub.s32 %s16, %s35
    %p37 = scmp.eq.s32.totalorder %s36, 0
    %s39 = sadd.s32 %s38, 1
    %s40 = scalar_select %p37, %s38, %s39
    %p43 = pneg %p37
    %p44 = scmp.eq.s32.totalorder %s9, 6
    %p45 = por %p43, %p44
    %p46 = scmp.ne.s32.totalorder %s38, %s41
    %p47 = scmp.eq.s32.totalorder %s9, 0
    %p48 = por %p46, %p47
    %p49 = scmp.ne.s32.totalorder %s38, %s41
    %p50 = scmp.eq.s32.totalorder %s14, 6
    %p51 = por %p49, %p50
    %p52 = scmp.ne.s32.totalorder %s41, %s42
    %p53 = scmp.eq.s32.totalorder %s14, 0
    %p54 = por %p52, %p53
    %p55 = scmp.ne.s32.totalorder %s41, %s42
    %p56 = scmp.eq.s32.totalorder %s15, 6
    %p57 = por %p55, %p56
    %p59 = scmp.ne.s32.totalorder %s42, %s58
    %p60 = scmp.eq.s32.totalorder %s15, 0
    %p61 = por %p59, %p60
    %s62 = ssub.s32 %s17, %s31
    %s63 = ssub.s32 %s18, %s27
    %s64 = sor.u32 %s62, %s63
    %p65 = scmp.eq.s32.totalorder %s64, 0
    %s67 = sadd.s32 %s66, 1
    %s68 = scalar_select %p65, %s66, %s67
    %p71 = pneg %p65
    %p72 = scmp.eq.s32.totalorder %s9, 6
    %p73 = por %p71, %p72
    %p74 = scmp.ne.s32.totalorder %s66, %s69
    %p75 = scmp.eq.s32.totalorder %s9, 0
    %p76 = por %p74, %p75
    %p77 = scmp.ne.s32.totalorder %s66, %s69
    %p78 = scmp.eq.s32.totalorder %s14, 6
    %p79 = por %p77, %p78
    %p80 = scmp.ne.s32.totalorder %s69, %s70
    %p81 = scmp.eq.s32.totalorder %s14, 0
    %p82 = por %p80, %p81
    %p83 = scmp.ne.s32.totalorder %s69, %s70
    %p84 = scmp.eq.s32.totalorder %s15, 6
    %p85 = por %p83, %p84
    %p87 = scmp.ne.s32.totalorder %s70, %s86
    %p88 = scmp.eq.s32.totalorder %s15, 0
    %p89 = por %p87, %p88
    %s90 = ssub.s32 %s17, %s31
    %s91 = ssub.s32 %s18, %s27
    %s92 = sor.u32 %s90, %s91
    %p93 = scmp.eq.s32.totalorder %s92, 0
    %s95 = sadd.s32 %s94, 1
    %s96 = scalar_select %p93, %s94, %s95
    %p99 = pneg %p93
    %p100 = scmp.eq.s32.totalorder %s9, 6
    %p101 = por %p99, %p100
    %p102 = scmp.ne.s32.totalorder %s94, %s97
    %p103 = scmp.eq.s32.totalorder %s9, 0
    %p104 = por %p102, %p103
    %p105 = scmp.ne.s32.totalorder %s94, %s97
    %p106 = scmp.eq.s32.totalorder %s14, 6
    %p107 = por %p105, %p106
    %p108 = scmp.ne.s32.totalorder %s97, %s98
    %p109 = scmp.eq.s32.totalorder %s14, 0
    %p110 = por %p108, %p109
    %p111 = scmp.ne.s32.totalorder %s97, %s98
    %p112 = scmp.eq.s32.totalorder %s15, 6
    %p113 = por %p111, %p112
    %p115 = scmp.ne.s32.totalorder %s98, %s114
    %p116 = scmp.eq.s32.totalorder %s15, 0
    %p117 = por %p115, %p116
    %s118 = ssub.s32 %s17, %s31
    %s119 = ssub.s32 %s16, %s35
    %s120 = sor.u32 %s118, %s119
    %s121 = ssub.s32 %s18, %s27
    %s122 = sor.u32 %s120, %s121
    %p123 = scmp.eq.s32.totalorder %s122, 0
    %s125 = sadd.s32 %s124, 1
    %s126 = scalar_select %p123, %s124, %s125
    %p129 = pneg %p123
    %p130 = scmp.eq.s32.totalorder %s9, 6
    %p131 = por %p129, %p130
    %p132 = scmp.ne.s32.totalorder %s124, %s127
    %p133 = scmp.eq.s32.totalorder %s9, 0
    %p134 = por %p132, %p133
    %p135 = scmp.ne.s32.totalorder %s124, %s127
    %p136 = scmp.eq.s32.totalorder %s14, 6
    %p137 = por %p135, %p136
    %p138 = scmp.ne.s32.totalorder %s127, %s128
    %p139 = scmp.eq.s32.totalorder %s14, 0
    %p140 = por %p138, %p139
    %p141 = scmp.ne.s32.totalorder %s127, %s128
    %p142 = scmp.eq.s32.totalorder %s15, 6
    %p143 = por %p141, %p142
    %p145 = scmp.ne.s32.totalorder %s128, %s144
    %p146 = scmp.eq.s32.totalorder %s15, 0
    %p147 = por %p145, %p146
    %p148 = scmp.le.s32.totalorder 1, %s9
    %p149 = scmp.lt.s32.totalorder %s9, 8
    %p150 = pnand %p148, %p149
    %p151 = pneg %p150
    // Predicated region
    $region9: #{ensemble_linear.1} parent=5 // pred_check
      _
    $region10: #{ensemble_linear.1} parent=5 // pred_check_branch
      %153 = sbr.rel (%p150) target = $region12
    $region11: #{ensemble_linear.1} parent=5 // pred_region
      %s154 = ssub.s32 %s9, 1
      // Predicated region
      $region13: #{ensemble_linear.1} parent=11 // pred_check
        %p155 = pneg %p54
      $region14: #{ensemble_linear.1} parent=11 // pred_check_branch
        %157 = sbr.rel (%p155) target = $region16
      $region15: #{ensemble_linear.1} parent=11 // pred_region
        %s158 = smul.u32 2, %s19
        %p159 = scmp.lt.s32.totalorder %s158, 1
        %s160 = scalar_select %p159, %s158, 1
        %s161 = smul.addr %s160, 8
        %s162 = scalar_lea.vmem %s0, %s161
        %s163 = smul.u32 2, %s19
      $region16: #{ensemble_linear.1} parent=11 // pred_fallthru
        _
    $region12: #{ensemble_linear.1} parent=5 // pred_fallthru
      _
    %p164 = scmp.lt.s32.totalorder %s9, 7
    // Predicated region
    $region17: #{ensemble_linear.1} parent=5 // pred_check
      %p165 = pneg %p164
    $region18: #{ensemble_linear.1} parent=5 // pred_check_branch
      %167 = sbr.rel (%p165) target = $region20
    $region19: #{ensemble_linear.1} parent=5 // pred_region
      // Predicated region
      $region21: #{ensemble_linear.1} parent=19 // pred_check
        %p168 = pneg %p76
      $region22: #{ensemble_linear.1} parent=19 // pred_check_branch
        %170 = sbr.rel (%p168) target = $region24
      $region23: #{ensemble_linear.1} parent=19 // pred_region
        %p171 = scmp.lt.s32.totalorder %s17, 6
        %s172 = scalar_select %p171, %s17, 6
        %p173 = scmp.lt.s32.totalorder %s18, 0
        %s174 = scalar_select %p173, %s18, 0
        %s175 = smul.addr %s172, 4
        %s176 = sadd.s32 %s174, %s175
        %s177 = smul.addr %s176, 8
        %s178 = scalar_lea.vmem %s1, %s177
      $region24: #{ensemble_linear.1} parent=19 // pred_fallthru
        _
      // Predicated region
      $region25: #{ensemble_linear.1} parent=19 // pred_check
        %p179 = pneg %p104
      $region26: #{ensemble_linear.1} parent=19 // pred_check_branch
        %181 = sbr.rel (%p179) target = $region28
      $region27: #{ensemble_linear.1} parent=19 // pred_region
        %p182 = scmp.lt.s32.totalorder %s17, 6
        %s183 = scalar_select %p182, %s17, 6
        %p184 = scmp.lt.s32.totalorder %s18, 0
        %s185 = scalar_select %p184, %s18, 0
        %s186 = sadd.s32 %s185, %s183
        %s187 = scalar_lea.vmem %s2, %s186
      $region28: #{ensemble_linear.1} parent=19 // pred_fallthru
        _
    $region20: #{ensemble_linear.1} parent=5 // pred_fallthru
      _
    %p188 = scmp.le.s32.totalorder 1, %s9
    %p189 = scmp.lt.s32.totalorder %s9, 8
    %p190 = pnand %p188, %p189
    %p191 = pneg %p190
    // Predicated region
    $region29: #{ensemble_linear.1} parent=5 // pred_check
      _
    $region30: #{ensemble_linear.1} parent=5 // pred_check_branch
      %193 = sbr.rel (%p190) target = $region32
    $region31: #{ensemble_linear.1} parent=5 // pred_region
      %s194 = ssub.s32 %s9, 1
      %s195 = smul.u32 2, %s19
      %p196 = scmp.lt.s32.totalorder %s195, 1
      %s197 = scalar_select %p196, %s195, 1
      %s198 = smul.addr %s197, 8
      %s199 = scalar_lea.vmem %s0, %s198
      %p200 = pneg %p54
      %p201 = pneg %p51
      %p202 = scmp.lt.s32.totalorder %s20, 6
      %s203 = scalar_select %p202, %s20, 6
      %p204 = scmp.lt.s32.totalorder %s21, 0
      %s205 = scalar_select %p204, %s21, 0
      %s206 = smul.addr %s203, 4
      %s207 = sadd.s32 %s205, %s206
      %s208 = smul.addr %s207, 8
      %s209 = scalar_lea.vmem %s1, %s208
      %p210 = pneg %p82
      %p211 = pneg %p79
      %p212 = scmp.lt.s32.totalorder %s20, 6
      %s213 = scalar_select %p212, %s20, 6
      %p214 = scmp.lt.s32.totalorder %s21, 0
      %s215 = scalar_select %p214, %s21, 0
      %s216 = sadd.s32 %s215, %s213
      %s217 = scalar_lea.vmem %s2, %s216
      %p218 = pneg %p110
      %p219 = pneg %p107
      %p220 = pneg %p140
      %p221 = pneg %p137
      %s222 = smul.u32 2, %s19
      %p223 = scmp.lt.s32.totalorder %s20, 6
      %s224 = scalar_select %p223, %s20, 6
      %p225 = scmp.lt.s32.totalorder %s222, 1
      %s226 = scalar_select %p225, %s222, 1
      %p227 = scmp.lt.s32.totalorder %s21, 0
      %s228 = scalar_select %p227, %s21, 0
      %s229 = sadd.s32 %s228, %s226
      %s230 = smul.addr %s224, 2
      %s231 = sadd.s32 %s229, %s230
      %s232 = smul.addr %s231, 8
      %s233 = scalar_lea.vmem %s3, %s232
      %s234 = smul.u32 2, %s19
      %p235 = scmp.lt.s32.totalorder %s234, 1
      %s236 = scalar_select %p235, %s234, 1
      %s237 = smul.addr %s236, 8
      %s238 = scalar_lea.vmem %s0, %s237
      %s239 = smul.u32 2, %s19
      %p240 = scmp.lt.s32.totalorder %s20, 6
      %s241 = scalar_select %p240, %s20, 6
      %p242 = scmp.lt.s32.totalorder %s21, 0
      %s243 = scalar_select %p242, %s21, 0
      %s244 = smul.addr %s241, 4
      %s245 = sadd.s32 %s243, %s244
      %s246 = smul.addr %s245, 8
      %s247 = scalar_lea.vmem %s1, %s246
      %p248 = scmp.lt.s32.totalorder %s20, 6
      %s249 = scalar_select %p248, %s20, 6
      %p250 = scmp.lt.s32.totalorder %s21, 0
      %s251 = scalar_select %p250, %s21, 0
      %s252 = sadd.s32 %s251, %s249
      %s253 = scalar_lea.vmem %s2, %s252
      %s254 = smul.u32 2, %s19
      %p255 = scmp.lt.s32.totalorder %s20, 6
      %s256 = scalar_select %p255, %s20, 6
      %p257 = scmp.lt.s32.totalorder %s254, 1
      %s258 = scalar_select %p257, %s254, 1
      %p259 = scmp.lt.s32.totalorder %s21, 0
      %s260 = scalar_select %p259, %s21, 0
      %s261 = sadd.s32 %s260, %s258
      %s262 = smul.addr %s256, 2
      %s263 = sadd.s32 %s261, %s262
      %s264 = smul.addr %s263, 8
      %s265 = scalar_lea.vmem %s3, %s264
      %s266 = smul.u32 2, %s19
      %v267 = vld [vmem:[%s238] sm:$0xff]
      %v268 = vld [vmem:[%s238 + $0x8] sm:$0xff]
      %v269 = vld [vmem:[%s247] sm:$0xff]
      %v270 = vld [vmem:[%s247 + $0x8] sm:$0xff]
      %v271 = vld [vmem:[%s247 + $0x10] sm:$0xff]
      %v272 = vld [vmem:[%s247 + $0x18] sm:$0xff]
      %v273 = vld [vmem:[%s253] sm:$0x1]
      %v275 = vlaneseq
      %v276 = vshrl.u32 %v275, 7
      %v277 = vsub.s32 0, %v276
      %v278 = vrot.slane %v273, %v277
      %vm280 = vcmask 261120
      %v282 = vsel %vm280, %v267, 0
      %v285 = vsel %vm280, %v268, 0
      %287 = vmatprep.subr.mxu0 0.0
      %288 = vmatpush1.msra.mxu0 0.0
      %289 = vmatprep.subr.mxu0 0.0
      %290 = vmatpush1.msra.mxu0 0.0
      %291 = vmatprep.subr.mxu0 0.0
      %292 = vmatpush1.msra.mxu0 0.0
      %293 = vmatprep.subr.mxu0 0.0
      %294 = vmatpush1.msra.mxu0 0.0
      %295 = vmatprep.subr.mxu0 0.0
      %296 = vmatpush1.msra.mxu0 0.0
      %297 = vmatprep.subr.mxu0 0.0
      %298 = vmatpush1.msra.mxu0 0.0
      %299 = vmatprep.subr.mxu0 0.0
      %300 = vmatpush1.msra.mxu0 0.0
      %301 = vmatprep.subr.mxu0 0.0
      %302 = vmatpush1.msra.mxu0 0.0
      %303 = vmatprep.subr.mxu0 0.0
      %304 = vmatpush1.msra.mxu0 0.0
      %305 = vmatprep.subr.mxu0 0.0
      %306 = vmatpush1.msra.mxu0 0.0
      %307 = vmatprep.subr.mxu0 0.0
      %308 = vmatpush1.msra.mxu0 0.0
      %309 = vmatprep.subr.mxu0 0.0
      %310 = vmatpush1.msra.mxu0 0.0
      %311 = vmatprep.subr.mxu0 0.0
      %312 = vmatpush1.msra.mxu0 %v272
      %313 = vmatprep.subr.mxu0 0.0
      %314 = vmatpush1.msra.mxu0 %v271
      %315 = vmatprep.subr.mxu0 0.0
      %316 = vmatpush1.msra.mxu0 %v270
      %317 = vmatprep.subr.mxu0 0.0
      %318 = vmatpush1.msra.mxu0 %v269
      %319 = vmatprep.subr.mxu0 0.0
      %320 = vmatpush2.msra.mxu0 0.0
      %321 = vmatprep.subr.mxu0 0.0
      %322 = vmatpush2.msra.mxu0 0.0
      %323 = vmatprep.subr.mxu0 0.0
      %324 = vmatpush2.msra.mxu0 0.0
      %325 = vmatprep.subr.mxu0 0.0
      %326 = vmatpush2.msra.mxu0 0.0
      %327 = vmatprep.subr.mxu0 0.0
      %328 = vmatpush2.msra.mxu0 0.0
      %329 = vmatprep.subr.mxu0 0.0
      %330 = vmatpush2.msra.mxu0 0.0
      %331 = vmatprep.subr.mxu0 0.0
      %332 = vmatpush2.msra.mxu0 0.0
      %333 = vmatprep.subr.mxu0 0.0
      %334 = vmatpush2.msra.mxu0 0.0
      %335 = vmatprep.subr.mxu0 0.0
      %336 = vmatpush2.msra.mxu0 0.0
      %337 = vmatprep.subr.mxu0 0.0
      %338 = vmatpush2.msra.mxu0 0.0
      %339 = vmatprep.subr.mxu0 0.0
      %340 = vmatpush2.msra.mxu0 0.0
      %341 = vmatprep.subr.mxu0 0.0
      %342 = vmatpush2.msra.mxu0 0.0
      %343 = vmatprep.subr.mxu0 0.0
      %344 = vmatpush2.msra.mxu0 0.0
      %345 = vmatprep.subr.mxu0 0.0
      %346 = vmatpush2.msra.mxu0 0.0
      %347 = vmatprep.subr.mxu0 0.0
      %348 = vmatpush2.msra.mxu0 0.0
      %349 = vmatprep.subr.mxu0 0.0
      %350 = vmatpush2.msra.mxu0 0.0
      %351 = vmatprep.mubr.f32.mxu0 0.0
      %352 = vmatmul.mubr.f32.gmra.mxu0 %v282
      %v353 = vpop.f32.mrf.mxu0
      %v354 = vadd.f32 %v278, %v353
      %v355 = vpop.f32.mrf.mxu0
      %356 = vmatprep.mubr.f32.mxu0 0.0
      %357 = vmatmul.mubr.f32.gmra.mxu0 %v285
      %v358 = vpop.f32.mrf.mxu0
      %v359 = vadd.f32 %v278, %v358
      %v360 = vpop.f32.mrf.mxu0
      %361 = vdwg.mxu0
      %362 = vst [vmem:[%s265] sm:$0xff] %v354
      %363 = vst [vmem:[%s265 + $0x8] sm:$0xff] %v359
      %s364 = smul.u32 2, %s19
      %p365 = scmp.lt.s32.totalorder %s20, 6
      %s366 = scalar_select %p365, %s20, 6
      %p367 = scmp.lt.s32.totalorder %s364, 1
      %s368 = scalar_select %p367, %s364, 1
      %p369 = scmp.lt.s32.totalorder %s21, 0
      %s370 = scalar_select %p369, %s21, 0
      %s371 = sadd.s32 %s370, %s368
      %s372 = smul.addr %s366, 2
      %s373 = sadd.s32 %s371, %s372
      %s374 = smul.addr %s373, 8
      %s375 = scalar_lea.vmem %s3, %s374
      // Predicated region
      $region33: #{ensemble_linear.1} parent=31 // pred_check
        %p376 = pneg %p137
      $region34: #{ensemble_linear.1} parent=31 // pred_check_branch
        %378 = sbr.rel (%p376) target = $region36
      $region35: #{ensemble_linear.1} parent=31 // pred_region
        %s379 = smul.u32 2, %s19
      $region36: #{ensemble_linear.1} parent=31 // pred_fallthru
        _
    $region32: #{ensemble_linear.1} parent=5 // pred_fallthru
      _
    %p380 = scmp.le.s32.totalorder 2, %s9
    // Predicated region
    $region37: #{ensemble_linear.1} parent=5 // pred_check
      %p381 = pneg %p380
    $region38: #{ensemble_linear.1} parent=5 // pred_check_branch
      %383 = sbr.rel (%p381) target = $region40
    $region39: #{ensemble_linear.1} parent=5 // pred_region
      %s384 = ssub.s32 %s9, 2
      // Predicated region
      $region41: #{ensemble_linear.1} parent=39 // pred_check
        %p385 = pneg %p143
      $region42: #{ensemble_linear.1} parent=39 // pred_check_branch
        %387 = sbr.rel (%p385) target = $region44
      $region43: #{ensemble_linear.1} parent=39 // pred_region
        %s388 = smul.u32 2, %s22
        %p389 = scmp.lt.s32.totalorder %s23, 6
        %s390 = scalar_select %p389, %s23, 6
        %p391 = scmp.lt.s32.totalorder %s388, 1
        %s392 = scalar_select %p391, %s388, 1
        %p393 = scmp.lt.s32.totalorder %s24, 0
        %s394 = scalar_select %p393, %s24, 0
        %s395 = sadd.s32 %s394, %s392
        %s396 = smul.addr %s390, 2
        %s397 = sadd.s32 %s395, %s396
        %s398 = smul.addr %s397, 8
        %s399 = scalar_lea.vmem %s3, %s398
      $region44: #{ensemble_linear.1} parent=39 // pred_fallthru
        _
    $region40: #{ensemble_linear.1} parent=5 // pred_fallthru
      _
  $region6: #{ensemble_linear.1} parent=0 // loop_footer
    %s13 = sadd.s32 1, %s9
  $region7: #{ensemble_linear.1} parent=0 // loop_footer_branch
    %8 = sbr.rel target = $region3
  $region8: #{ensemble_linear.1} parent=0 // loop_exit
    _

</llo_original>
